<compile_context>
chip_gen: v7x
topology: tpu7x:2x2x1
jax: 0.10.0
libtpu: 0.0.40
codegen_flags: <defaults>
</compile_context>

<pallas_src>
import functools

import jax
import jax.numpy as jnp
from jax.experimental import pallas as pl
from jax.experimental.pallas import tpu as pltpu


# ---------------------------------------------------------------------------
# Hardware queries (all defensive: fall back to safe values).
# ---------------------------------------------------------------------------
def _vmem_capacity_bytes() -> int:
    try:
        info = pltpu.get_tpu_info()
        cap = int(getattr(info, "vmem_capacity_bytes", 0))
        if cap > 0:
            return cap
    except Exception:
        pass
    # Generation-aware fallback: 64 MiB per TC on v7x, 128 MiB on v5e/v6e.
    try:
        kind = jax.devices()[0].device_kind.lower()
        if "v7" in kind or "7x" in kind:
            return 64 << 20
    except Exception:
        pass
    return 128 << 20


def _num_tensorcores() -> int:
    try:
        info = pltpu.get_tpu_info()
        for attr in ("num_cores", "core_count", "tensorcore_count", "num_tensor_cores"):
            v = getattr(info, attr, None)
            if isinstance(v, int) and v > 0:
                return v
    except Exception:
        pass
    try:
        kind = jax.devices()[0].device_kind.lower()
        if "v7" in kind or "7x" in kind:
            return 2
    except Exception:
        pass
    return 1


# ---------------------------------------------------------------------------
# Tile chooser: byte-based block sizing, VMEM-capped, megacore-aware.
# ---------------------------------------------------------------------------
def _choose_tile_rows(rows: int, d: int, itemsize: int) -> int:
    # Sub-32-bit dtypes pack along sublanes: keep row tiles full-vreg aligned.
    packing = max(1, 4 // max(1, itemsize))
    align = 8 * packing                      # 8 (f32), 16 (bf16), 32 (int8/fp8)

    if rows <= align:
        # Block dim equal to the full array dim is always a legal block shape.
        return rows

    row_bytes = max(1, d * itemsize)

    # Byte-based target: ~4 MiB x-blocks (2-8 MiB sweet spot on v5e/v6e/v7x).
    target_block_bytes = 4 << 20
    tile = max(align, target_block_bytes // row_bytes)

    # Cap against VMEM: double-buffered in + out (native dtype) plus roughly one
    # f32-row-wide temporary (the upcast is no longer kept live across the
    # reduction), minus the resident f32 scale and some slack.
    vmem = _vmem_capacity_bytes()
    budget = int(0.85 * vmem) - 2 * d * 4 - (2 << 20)
    bytes_per_row = d * (4 * itemsize + 4)
    tile = min(tile, max(align, budget // max(1, bytes_per_row)))

    tile = max(align, (tile // align) * align)

    # Keep >= 8 steps per TensorCore so megacore sharding and the DMA prefetch
    # pipeline stay busy, but never shrink blocks below ~512 KiB.
    min_steps = 8 * _num_tensorcores()
    steps = -(-rows // tile)
    if steps < min_steps:
        cand = -(-rows // min_steps)
        cand = max(align, -(-cand // align) * align)
        if cand * row_bytes >= (512 << 10):
            tile = cand

    if tile >= rows:
        return rows
    return tile


# ---------------------------------------------------------------------------
# Kernel body.
# ---------------------------------------------------------------------------
def _rmsnorm_kernel(x_ref, scale_ref, o_ref, *, epsilon: float, inv_d: float):
    # x_ref:     (TILE_ROWS, D)  native dtype
    # scale_ref: (1, D)          f32, resident (constant index_map)
    # o_ref:     (TILE_ROWS, D)
    x32 = x_ref[...].astype(jnp.float32)
    # mean(x^2) as sum(x^2) * (1/D): the constant multiply folds at trace time.
    ms = jnp.sum(x32 * x32, axis=-1, keepdims=True) * inv_d        # (TILE_ROWS, 1)
    inv = jax.lax.rsqrt(ms + epsilon)                              # EUP rsqrt
    # Re-read x_ref for the store so the full-tile f32 upcast need not stay
    # live across the lane reduction (vld is cheap; VMEM/vreg pressure isn't).
    o_ref[...] = (scale_ref[...] * x_ref[...].astype(jnp.float32) * inv).astype(o_ref.dtype)


# ---------------------------------------------------------------------------
# Wrapper.
# ---------------------------------------------------------------------------
def rmsnorm(x: jax.Array, scale: jax.Array, epsilon: float = 1e-6,
            tile_rows: int | None = None) -> jax.Array:
    """Apply llama2-style RMSNorm (the module calls it LayerNorm) over the last axis."""
    orig_shape = x.shape
    d = int(orig_shape[-1])
    rows = 1
    for s in orig_shape[:-1]:
        rows *= int(s)

    itemsize = jnp.dtype(x.dtype).itemsize
    if tile_rows is None:
        tile_rows = _choose_tile_rows(rows, d, itemsize)
    tile_rows = min(tile_rows, rows)

    x2d = x.reshape(rows, d)
    scale2d = scale.reshape(1, d).astype(jnp.float32)   # pre-cast once; stays resident

    grid = (pl.cdiv(rows, tile_rows),)

    # Scoped-VMEM budget: double-buffered x + o tiles, one f32-tile worth of
    # temporaries, the resident f32 scale, plus slack. Clamped to capacity
    # (0.90 on 64 MiB v7x parts, 0.95 on 128 MiB v5e/v6e parts).
    vmem = _vmem_capacity_bytes()
    frac = 0.90 if vmem <= (64 << 20) else 0.95
    vmem_limit = (4 * tile_rows * d * itemsize     # 2x-buffered in + out
                  + tile_rows * d * 4              # f32 intermediates
                  + 4 * d * 4                      # resident f32 scale buffers
                  + (2 << 20))                     # slack
    vmem_limit = int(min(max(vmem_limit, 32 << 20), frac * vmem))

    cost = pl.CostEstimate(
        flops=3 * rows * d,
        transcendentals=rows,
        bytes_accessed=2 * rows * d * itemsize + d * 4,
    )

    out = pl.pallas_call(
        functools.partial(_rmsnorm_kernel, epsilon=float(epsilon), inv_d=1.0 / d),
        out_shape=jax.ShapeDtypeStruct((rows, d), x.dtype),
        grid_spec=pltpu.PrefetchScalarGridSpec(
            num_scalar_prefetch=0,
            grid=grid,
            in_specs=[
                pl.BlockSpec((tile_rows, d), lambda i: (i, 0)),   # x tile
                pl.BlockSpec((1, d), lambda i: (0, 0)),           # scale (resident)
            ],
            out_specs=pl.BlockSpec((tile_rows, d), lambda i: (i, 0)),
        ),
        compiler_params=pltpu.CompilerParams(
            dimension_semantics=("parallel",),
            vmem_limit_bytes=vmem_limit),
        cost_estimate=cost,
    )(x2d, scale2d)

    return out.reshape(orig_shape)


def rmsnorm_ref(x, scale, epsilon=1e-6):
    x32 = x.astype(jnp.float32)
    inv = jax.lax.rsqrt(jnp.mean(x32 * x32, axis=-1, keepdims=True) + epsilon)
    return (scale.astype(jnp.float32) * x32 * inv).astype(x.dtype)


if __name__ == "__main__":
    key = jax.random.PRNGKey(0)

    # Primary small test (matches the module: scale = ones(model_dim)).
    batch, seq, model_dim = 2, 8, 128
    x = jax.random.normal(key, (batch, seq, model_dim), dtype=jnp.float32)
    scale = jnp.ones((model_dim,), dtype=jnp.float32)

    out = jax.block_until_ready(rmsnorm(x, scale, epsilon=1e-6))
    ref = rmsnorm_ref(x, scale, epsilon=1e-6)
    assert out.shape == x.shape
    assert jnp.allclose(out, ref, atol=1e-5, rtol=1e-5), "mismatch vs reference"

    # Non-multiple-of-8 row count: single full-rows block (no padding, no slice).
    x_odd = jax.random.normal(jax.random.PRNGKey(1), (3, 5, model_dim),
                              dtype=jnp.float32)
    out_odd = jax.block_until_ready(rmsnorm(x_odd, scale, epsilon=1e-6))
    ref_odd = rmsnorm_ref(x_odd, scale, epsilon=1e-6)
    assert jnp.allclose(out_odd, ref_odd, atol=1e-5, rtol=1e-5), "odd-rows mismatch"

    # Ragged grid path: rows (400) not a multiple of the forced tile (64); the
    # last block is masked by Pallas, exercising the no-pad edge handling.
    d2 = 256
    x_rag = jax.random.normal(jax.random.PRNGKey(2), (4, 100, d2), dtype=jnp.float32)
    scale_rag = jax.random.normal(jax.random.PRNGKey(3), (d2,), dtype=jnp.float32)
    out_rag = jax.block_until_ready(rmsnorm(x_rag, scale_rag, epsilon=1e-6,
                                            tile_rows=64))
    ref_rag = rmsnorm_ref(x_rag, scale_rag, epsilon=1e-6)
    assert jnp.allclose(out_rag, ref_rag, atol=1e-5, rtol=1e-5), "ragged mismatch"

    # bf16 activations exercise the dtype-aware sublane alignment.
    x_bf16 = x.astype(jnp.bfloat16)
    out_bf16 = jax.block_until_ready(rmsnorm(x_bf16, scale, epsilon=1e-6))
    ref_bf16 = rmsnorm_ref(x_bf16, scale, epsilon=1e-6)
    assert jnp.allclose(out_bf16.astype(jnp.float32),
                        ref_bf16.astype(jnp.float32), atol=2e-2, rtol=2e-2)

    print("KERNEL_OK")
</pallas_src>

<mosaic_0001>
module attributes {stable_mosaic.version = 11 : i64} {
  func.func @_rmsnorm_kernel(%arg0: i32, %arg1: memref<16x128xf32, #tpu.memory_space<vmem>>, %arg2: memref<1x128xf32, #tpu.memory_space<vmem>>, %arg3: memref<16x128xf32, #tpu.memory_space<vmem>>) attributes {dimension_semantics = [#tpu.dimension_semantics<parallel>], iteration_bounds = array<i64: 1>, scalar_prefetch = 0 : i64, scratch_operands = 0 : i64, tpu.core_type = #tpu.core_type<tc>, window_params = [{transform_indices = @transform_0, window_bounds = array<i64: 16, 128>}, {pipeline_mode = #tpu.pipeline_mode<synchronous>, transform_indices = @transform_1, window_bounds = array<i64: 1, 128>}, {transform_indices = @transform_2, window_bounds = array<i64: 16, 128>}]} {
    %c0 = arith.constant 0 : index
    %c0_0 = arith.constant 0 : index
    %0 = vector.load %arg1[%c0, %c0_0] : memref<16x128xf32, #tpu.memory_space<vmem>>, vector<16x128xf32>
    %1 = arith.mulf %0, %0 : vector<16x128xf32>
    %cst = arith.constant dense<0.000000e+00> : vector<16xf32>
    %2 = vector.multi_reduction <add>, %1, %cst [1] : vector<16x128xf32> to vector<16xf32>
    %3 = vector.shape_cast %2 : vector<16xf32> to vector<16x1xf32>
    %cst_1 = arith.constant 7.812500e-03 : f32
    %4 = vector.broadcast %cst_1 : f32 to vector<16x1xf32>
    %5 = arith.mulf %3, %4 : vector<16x1xf32>
    %cst_2 = arith.constant 9.99999997E-7 : f32
    %6 = vector.broadcast %cst_2 : f32 to vector<16x1xf32>
    %7 = arith.addf %5, %6 : vector<16x1xf32>
    %8 = math.rsqrt %7 : vector<16x1xf32>
    %c0_3 = arith.constant 0 : index
    %c0_4 = arith.constant 0 : index
    %9 = vector.load %arg2[%c0_3, %c0_4] : memref<1x128xf32, #tpu.memory_space<vmem>>, vector<1x128xf32>
    %c0_5 = arith.constant 0 : index
    %c0_6 = arith.constant 0 : index
    %10 = vector.load %arg1[%c0_5, %c0_6] : memref<16x128xf32, #tpu.memory_space<vmem>>, vector<16x128xf32>
    %11 = vector.broadcast %9 : vector<1x128xf32> to vector<16x128xf32>
    %12 = arith.mulf %11, %10 : vector<16x128xf32>
    %13 = vector.broadcast %8 : vector<16x1xf32> to vector<16x128xf32>
    %14 = arith.mulf %12, %13 : vector<16x128xf32>
    %c0_7 = arith.constant 0 : index
    %c0_8 = arith.constant 0 : index
    %15 = vector.load %arg3[%c0_7, %c0_8] : memref<16x128xf32, #tpu.memory_space<vmem>>, vector<16x128xf32>
    tpu.vector_store %arg3[%c0_7, %c0_8], %14 {strides = array<i32>} : memref<16x128xf32, #tpu.memory_space<vmem>>, vector<16x128xf32>,
    return
  }
  func.func @transform_0(%arg0: i32) -> (i32, i32) {
    %c0_i32 = arith.constant 0 : i32
    %c0_i32_0 = arith.constant 0 : i32
    return %arg0, %c0_i32 : i32, i32
  }
  func.func @transform_1(%arg0: i32) -> (i32, i32) {
    %c0_i32 = arith.constant 0 : i32
    %c0_i32_0 = arith.constant 0 : i32
    %c0_i32_1 = arith.constant 0 : i32
    return %c0_i32, %c0_i32_0 : i32, i32
  }
  func.func @transform_2(%arg0: i32) -> (i32, i32) {
    %c0_i32 = arith.constant 0 : i32
    %c0_i32_0 = arith.constant 0 : i32
    return %arg0, %c0_i32 : i32, i32
  }
}

</mosaic_0001>

<llo_original>
// kernel: tpu_custom_call.1
$region0: #{tpu_custom_call.1}
  #allocation0 [shape = 'u32[]', space=smem, size = 0x4, offset = 0x4, fixed_abs, tag = 'smem constant byte address 0x4 - core index']
  #allocation1 [shape = 'u32[144,128]{1,0:T(1,128)}', space=vmem, size = 0x12000, scoped, tag = 'internal scratch']
  %s0 = inlined_call_operand.hbm [shape: f32[16,128], index: 0, kind: input, shape index: {}]
  %s1 = inlined_call_operand.vmem [shape: f32[1,128], index: 1, kind: input, shape index: {}]
  %s2 = inlined_call_operand.hbm [shape: f32[16,128], index: 2, kind: output, shape index: {}]
  %s3 = sld [smem:[#allocation0]]
  $region22: #{tpu_custom_call.1} parent=0
    _
  %s5 = ssub.s32 1, %s3
  %s6 = scalar_select 0, %s5, %s3
  $region1: #{tpu_custom_call.1} parent=0
    #allocation2 [shape = 'u8[8192]{0}', space=vmem, size = 0x2000, scoped, tag = 'input window, operand 0, single buffered']
    #allocation3 [shape = 's32[1]{0}', space=sflag, size = 0x4, scoped, tag = 'scoped memory for tpu_custom_call.1']
    #allocation4 [shape = 's32[1]{0}', space=sflag, size = 0x4, scoped, tag = 'scoped memory for tpu_custom_call.1']
    #allocation5 [shape = 'u8[8192]{0}', space=vmem, size = 0x2000, scoped, tag = 'output window, operand 0, single buffered']
    %7 = vsyncpa [#allocation3], 0
    %8 = vsyncpa [#allocation4], 0
    // Predicated region
    $region2: #{tpu_custom_call.1} parent=1 // pred_check
      _
    $region3: #{tpu_custom_call.1} parent=1 // pred_check_branch
      %10 = sbr.rel (0) target = $region5
    $region4: #{tpu_custom_call.1} parent=1 // pred_region
      %s12 = ssub.s32 256, 256
      %13 = vsyncadd [#allocation3], %s12
      %s14 = sshll.u32 [#allocation2], 4
      %s15 = int_to_ptr.vmem [resolvable:$true] %s14
      %20 = dma.hbm_to_vmem [thread:$0]  %s0, 256, %s15, [#allocation3], 128, 128, 8
    $region5: #{tpu_custom_call.1} parent=1 // pred_fallthru
      _
    // Predicated region
    $region6: #{tpu_custom_call.1} parent=1 // pred_check
      _
    $region7: #{tpu_custom_call.1} parent=1 // pred_check_branch
      %22 = sbr.rel (0) target = $region9
    $region8: #{tpu_custom_call.1} parent=1 // pred_region
      _
    $region9: #{tpu_custom_call.1} parent=1 // pred_fallthru
      _
    // Predicated region
    $region10: #{tpu_custom_call.1} parent=1 // pred_check
      _
    $region11: #{tpu_custom_call.1} parent=1 // pred_check_branch
      %24 = sbr.rel (0) target = $region13
    $region12: #{tpu_custom_call.1} parent=1 // pred_region
      %25 = dma.done [#allocation3], 256
    $region13: #{tpu_custom_call.1} parent=1 // pred_fallthru
      _
    %v26 = vld [vmem:[#allocation2] sm:$0xff]
    %v27 = vld [vmem:[#allocation2 + $0x8] sm:$0xff]
    %v28 = vmul.f32 %v26, %v26
    %v29 = vmul.f32 %v27, %v27
    %30 = vadd.xlane.f32.xlu0 %v28
    %v31 = vpop.xlane.xlu0 %30
    %32 = vadd.xlane.f32.xlu0 %v29
    %v33 = vpop.xlane.xlu0 %32
    %v34 = vmul.f32 %v31, 0.0078125
    %v35 = vmul.f32 %v33, 0.0078125
    %v36 = vadd.f32 %v34, 1e-06
    %v37 = vadd.f32 %v35, 1e-06
    %v38 = vrsqrt.pop %v36
    %v39 = vrsqrt.pop %v37
    %v40 = vld [vmem:[%s1] sm:$0x1]
    %v42 = vlaneseq
    %v43 = vshrl.u32 %v42, 7
    %v44 = vsub.s32 0, %v43
    %v45 = vrot.slane %v40, %v44
    %v47 = vmul.f32 %v45, %v26
    %v48 = vmul.f32 %v45, %v27
    %v49 = vmul.f32 %v47, %v38
    %v50 = vmul.f32 %v48, %v39
    %51 = vst [vmem:[#allocation5] sm:$0xff] %v49
    %52 = vst [vmem:[#allocation5 + $0x8] sm:$0xff] %v50
    // Predicated region
    $region14: #{tpu_custom_call.1} parent=1 // pred_check
      _
    $region15: #{tpu_custom_call.1} parent=1 // pred_check_branch
      %54 = sbr.rel (0) target = $region17
    $region16: #{tpu_custom_call.1} parent=1 // pred_region
      %s56 = ssub.s32 256, 256
      %57 = vsyncadd [#allocation4], %s56
      %s58 = sshll.u32 [#allocation5], 4
      %s59 = int_to_ptr.vmem [resolvable:$true] %s58
      %64 = dma.vmem_to_hbm [thread:$0]  %s59, 256, %s2, [#allocation4], 128, 128, 8
    $region17: #{tpu_custom_call.1} parent=1 // pred_fallthru
      _
    // Predicated region
    $region18: #{tpu_custom_call.1} parent=1 // pred_check
      _
    $region19: #{tpu_custom_call.1} parent=1 // pred_check_branch
      %66 = sbr.rel (0) target = $region21
    $region20: #{tpu_custom_call.1} parent=1 // pred_region
      %67 = dma.done [#allocation4], 256
    $region21: #{tpu_custom_call.1} parent=1 // pred_fallthru
      _
    %68 = vsyncpa [#allocation3], 1
    %69 = vsyncpa [#allocation4], 1

</llo_original>
